<compile_context>
chip_gen: v7x
topology: tpu7x:2x2x1
jax: 0.10.0
libtpu: 0.0.40
codegen_flags: <defaults>
</compile_context>

<pallas_src>
import functools

import jax
import jax.numpy as jnp
from jax import lax
from jax.experimental import pallas as pl
from jax.experimental.pallas import tpu as pltpu

KH, KW = 3, 3  # depthwise kernel size


def _round_up(x, m):
    return (x + m - 1) // m * m


def dws_conv_kernel(x_ref, wdw_ref, bdw_ref, wpw_ref, bpw_ref, o_ref, *, img_w):
    # x_ref:   (C_in,  L)        L = B_TILE * L_img, flat spatial on lanes
    # wdw_ref: (9, C_in, 1)      depthwise taps, tap k = (dh, dw) = divmod(k, 3)
    # bdw_ref: (C_in, 1)
    # wpw_ref: (C_in, C_out, 1)  pointwise weights (transposed)
    # bpw_ref: (C_out, 1)
    # o_ref:   (C_out, L)        conv value at every flat position (invalid
    #                            positions hold garbage; wrapper slices them off)
    x = x_ref[...].astype(jnp.float32)                    # (C_in, L)
    lanes = x.shape[1]
    c_in = x.shape[0]

    # ---- depthwise 3x3 (VALID): 9 rolled taps + VPU FMA ------------------
    acc = x * wdw_ref[0].astype(jnp.float32)              # tap (0, 0): shift 0
    for k in range(1, KH * KW):
        dh, dw = divmod(k, KW)
        s = dh * img_w + dw                               # static flat shift
        # xs[p] = x[(p + s) mod L]  (== jnp.roll(x, -s)); wrap-around only
        # touches invalid output positions.
        xs = pltpu.roll(x, shift=lanes - s, axis=1)
        acc = acc + xs * wdw_ref[k].astype(jnp.float32)
    acc = acc + bdw_ref[...].astype(jnp.float32)          # (C_in, L)

    # ---- pointwise 1x1: C_in broadcast-FMAs on the VPU -------------------
    # TODO(synk): for realistic channel counts (>= ~128) route this through a
    # padded MXU jnp.dot (bf16 operands, preferred_element_type=f32) instead.
    y = bpw_ref[...].astype(jnp.float32) \
        + wpw_ref[0].astype(jnp.float32) * acc[0:1, :]
    for c in range(1, c_in):
        y = y + wpw_ref[c].astype(jnp.float32) * acc[c:c + 1, :]

    o_ref[...] = y.astype(o_ref.dtype)                    # lane-dense store


def depthwise_separable_conv2d(x, w_dw, b_dw, w_pw, b_pw):
    """x: (N, C_in, H, W). Returns (N, C_out, H-2, W-2) (VALID 3x3 dw + 1x1 pw)."""
    n, c_in, h, w = x.shape
    c_out = w_pw.shape[0]
    ho, wo = h - (KH - 1), w - (KW - 1)

    # ---- lane-dense flat-spatial layout ---------------------------------
    l_img = _round_up(h * w, 128)                 # per-image lane slot (>=128)
    # Aim for >= ~2048 lanes of work per grid step, but keep >=2 grid steps
    # when N allows (v7x has 2 TensorCores; batch axis is "parallel").
    b_tile = max(1, min(n, 2048 // l_img))
    if n >= 2:
        b_tile = max(1, min(b_tile, n // 2))
    n_pad = _round_up(n, b_tile)
    grid_n = n_pad // b_tile
    lanes = b_tile * l_img

    xp = jnp.pad(x, ((0, n_pad - n), (0, 0), (0, 0), (0, 0)))
    # (N,C,H,W) -> (C, N, H*W) -> pad spatial to L_img -> (C, N*L_img).
    xf = jnp.transpose(xp, (1, 0, 2, 3)).reshape(c_in, n_pad, h * w)
    xf = jnp.pad(xf, ((0, 0), (0, 0), (0, l_img - h * w)))
    xf = xf.reshape(c_in, n_pad * l_img)

    # ---- weights: contiguous per-tap / per-channel column layouts --------
    wdw = jnp.transpose(w_dw.reshape(c_in, KH * KW), (1, 0)).reshape(KH * KW, c_in, 1)
    bdw = b_dw.reshape(c_in, 1)
    wpw = jnp.transpose(w_pw.reshape(c_out, c_in), (1, 0)).reshape(c_in, c_out, 1)
    bpw = b_pw.reshape(c_out, 1)

    kernel = functools.partial(dws_conv_kernel, img_w=w)

    flops = 2 * (KH * KW * c_in + c_in * c_out) * n_pad * l_img
    bytes_accessed = (xf.size + c_out * n_pad * l_img) * x.dtype.itemsize

    out_flat = pl.pallas_call(
        kernel,
        out_shape=jax.ShapeDtypeStruct((c_out, n_pad * l_img), x.dtype),
        grid_spec=pltpu.PrefetchScalarGridSpec(
            num_scalar_prefetch=0,
            grid=(grid_n,),
            in_specs=[
                pl.BlockSpec((c_in, lanes), lambda i: (0, i)),
                pl.BlockSpec((KH * KW, c_in, 1), lambda i: (0, 0, 0)),
                pl.BlockSpec((c_in, 1), lambda i: (0, 0)),
                pl.BlockSpec((c_in, c_out, 1), lambda i: (0, 0, 0)),
                pl.BlockSpec((c_out, 1), lambda i: (0, 0)),
            ],
            out_specs=pl.BlockSpec((c_out, lanes), lambda i: (0, i)),
        ),
        compiler_params=pltpu.CompilerParams(
            dimension_semantics=("parallel",)),
        cost_estimate=pl.CostEstimate(
            flops=int(flops), transcendentals=0,
            bytes_accessed=int(bytes_accessed)),
    )(xf, wdw, bdw, wpw, bpw)

    # Un-flatten and drop invalid (halo / padding) positions in the wrapper.
    out = out_flat.reshape(c_out, n_pad, l_img)[:, :n, :h * w]
    out = out.reshape(c_out, n, h, w)[:, :, :ho, :wo]
    return jnp.transpose(out, (1, 0, 2, 3))


def reference(x, w_dw, b_dw, w_pw, b_pw):
    """Plain-JAX reference mirroring PyTorch nn.Conv2d semantics (NCHW)."""
    c_in = x.shape[1]
    dw = lax.conv_general_dilated(
        x, w_dw, window_strides=(1, 1), padding="VALID",
        dimension_numbers=("NCHW", "OIHW", "NCHW"),
        feature_group_count=c_in)
    dw = dw + b_dw[None, :, None, None]
    pw = lax.conv_general_dilated(
        dw, w_pw, window_strides=(1, 1), padding="VALID",
        dimension_numbers=("NCHW", "OIHW", "NCHW"))
    return pw + b_pw[None, :, None, None]


if __name__ == "__main__":
    key = jax.random.PRNGKey(0)
    N, C_IN, C_OUT, H, W = 2, 3, 10, 16, 16

    k_x, k_wdw, k_bdw, k_wpw, k_bpw = jax.random.split(key, 5)
    x = jax.random.normal(k_x, (N, C_IN, H, W), dtype=jnp.float32)

    # Parameter init with nn.Conv2d-compatible shapes:
    #   depthwise: weight (C_in, 1, 3, 3), bias (C_in,)
    #   pointwise: weight (C_out, C_in, 1, 1), bias (C_out,)
    fan_dw = 1 * KH * KW
    fan_pw = C_IN * 1 * 1
    w_dw = jax.random.uniform(k_wdw, (C_IN, 1, KH, KW), jnp.float32,
                              -1.0 / fan_dw ** 0.5, 1.0 / fan_dw ** 0.5)
    b_dw = jax.random.uniform(k_bdw, (C_IN,), jnp.float32,
                              -1.0 / fan_dw ** 0.5, 1.0 / fan_dw ** 0.5)
    w_pw = jax.random.uniform(k_wpw, (C_OUT, C_IN, 1, 1), jnp.float32,
                              -1.0 / fan_pw ** 0.5, 1.0 / fan_pw ** 0.5)
    b_pw = jax.random.uniform(k_bpw, (C_OUT,), jnp.float32,
                              -1.0 / fan_pw ** 0.5, 1.0 / fan_pw ** 0.5)

    out = depthwise_separable_conv2d(x, w_dw, b_dw, w_pw, b_pw)
    out = jax.block_until_ready(out)

    ref = jax.block_until_ready(reference(x, w_dw, b_dw, w_pw, b_pw))
    assert out.shape == (N, C_OUT, H - 2, W - 2), out.shape
    assert jnp.allclose(out, ref, atol=1e-4, rtol=1e-4), \
        float(jnp.max(jnp.abs(out - ref)))

    print("KERNEL_OK")
</pallas_src>

<mosaic_0001>
module attributes {stable_mosaic.version = 11 : i64} {
  func.func @dws_conv_kernel(%arg0: i32, %arg1: memref<3x256xf32, #tpu.memory_space<vmem>>, %arg2: memref<9x3x1xf32, #tpu.memory_space<vmem>>, %arg3: memref<3x1xf32, #tpu.memory_space<vmem>>, %arg4: memref<3x10x1xf32, #tpu.memory_space<vmem>>, %arg5: memref<10x1xf32, #tpu.memory_space<vmem>>, %arg6: memref<10x256xf32, #tpu.memory_space<vmem>>) attributes {dimension_semantics = [#tpu.dimension_semantics<parallel>], iteration_bounds = array<i64: 2>, scalar_prefetch = 0 : i64, scratch_operands = 0 : i64, tpu.core_type = #tpu.core_type<tc>, window_params = [{transform_indices = @transform_0, window_bounds = array<i64: 3, 256>}, {pipeline_mode = #tpu.pipeline_mode<synchronous>, transform_indices = @transform_1, window_bounds = array<i64: 9, 3, 1>}, {pipeline_mode = #tpu.pipeline_mode<synchronous>, transform_indices = @transform_2, window_bounds = array<i64: 3, 1>}, {pipeline_mode = #tpu.pipeline_mode<synchronous>, transform_indices = @transform_3, window_bounds = array<i64: 3, 10, 1>}, {pipeline_mode = #tpu.pipeline_mode<synchronous>, transform_indices = @transform_4, window_bounds = array<i64: 10, 1>}, {transform_indices = @transform_5, window_bounds = array<i64: 10, 256>}]} {
    %c0 = arith.constant 0 : index
    %c0_0 = arith.constant 0 : index
    %0 = vector.load %arg1[%c0, %c0_0] : memref<3x256xf32, #tpu.memory_space<vmem>>, vector<3x256xf32>
    %c0_1 = arith.constant 0 : index
    %c0_2 = arith.constant 0 : index
    %c0_3 = arith.constant 0 : index
    %1 = vector.load %arg2[%c0_1, %c0_2, %c0_3] : memref<9x3x1xf32, #tpu.memory_space<vmem>>, vector<1x3x1xf32>
    %2 = vector.shape_cast %1 : vector<1x3x1xf32> to vector<3x1xf32>
    %3 = vector.broadcast %2 : vector<3x1xf32> to vector<3x256xf32>
    %4 = arith.mulf %0, %3 : vector<3x256xf32>
    %c255_i32 = arith.constant 255 : i32
    %5 = tpu.dynamic_rotate %0 by %c255_i32 dim 1 : vector<3x256xf32>, i32 -> vector<3x256xf32>
    %c1 = arith.constant 1 : index
    %c0_4 = arith.constant 0 : index
    %c0_5 = arith.constant 0 : index
    %6 = vector.load %arg2[%c1, %c0_4, %c0_5] : memref<9x3x1xf32, #tpu.memory_space<vmem>>, vector<1x3x1xf32>
    %7 = vector.shape_cast %6 : vector<1x3x1xf32> to vector<3x1xf32>
    %8 = vector.broadcast %7 : vector<3x1xf32> to vector<3x256xf32>
    %9 = arith.mulf %5, %8 : vector<3x256xf32>
    %10 = arith.addf %4, %9 : vector<3x256xf32>
    %c254_i32 = arith.constant 254 : i32
    %11 = tpu.dynamic_rotate %0 by %c254_i32 dim 1 : vector<3x256xf32>, i32 -> vector<3x256xf32>
    %c2 = arith.constant 2 : index
    %c0_6 = arith.constant 0 : index
    %c0_7 = arith.constant 0 : index
    %12 = vector.load %arg2[%c2, %c0_6, %c0_7] : memref<9x3x1xf32, #tpu.memory_space<vmem>>, vector<1x3x1xf32>
    %13 = vector.shape_cast %12 : vector<1x3x1xf32> to vector<3x1xf32>
    %14 = vector.broadcast %13 : vector<3x1xf32> to vector<3x256xf32>
    %15 = arith.mulf %11, %14 : vector<3x256xf32>
    %16 = arith.addf %10, %15 : vector<3x256xf32>
    %c240_i32 = arith.constant 240 : i32
    %17 = tpu.dynamic_rotate %0 by %c240_i32 dim 1 : vector<3x256xf32>, i32 -> vector<3x256xf32>
    %c3 = arith.constant 3 : index
    %c0_8 = arith.constant 0 : index
    %c0_9 = arith.constant 0 : index
    %18 = vector.load %arg2[%c3, %c0_8, %c0_9] : memref<9x3x1xf32, #tpu.memory_space<vmem>>, vector<1x3x1xf32>
    %19 = vector.shape_cast %18 : vector<1x3x1xf32> to vector<3x1xf32>
    %20 = vector.broadcast %19 : vector<3x1xf32> to vector<3x256xf32>
    %21 = arith.mulf %17, %20 : vector<3x256xf32>
    %22 = arith.addf %16, %21 : vector<3x256xf32>
    %c239_i32 = arith.constant 239 : i32
    %23 = tpu.dynamic_rotate %0 by %c239_i32 dim 1 : vector<3x256xf32>, i32 -> vector<3x256xf32>
    %c4 = arith.constant 4 : index
    %c0_10 = arith.constant 0 : index
    %c0_11 = arith.constant 0 : index
    %24 = vector.load %arg2[%c4, %c0_10, %c0_11] : memref<9x3x1xf32, #tpu.memory_space<vmem>>, vector<1x3x1xf32>
    %25 = vector.shape_cast %24 : vector<1x3x1xf32> to vector<3x1xf32>
    %26 = vector.broadcast %25 : vector<3x1xf32> to vector<3x256xf32>
    %27 = arith.mulf %23, %26 : vector<3x256xf32>
    %28 = arith.addf %22, %27 : vector<3x256xf32>
    %c238_i32 = arith.constant 238 : i32
    %29 = tpu.dynamic_rotate %0 by %c238_i32 dim 1 : vector<3x256xf32>, i32 -> vector<3x256xf32>
    %c5 = arith.constant 5 : index
    %c0_12 = arith.constant 0 : index
    %c0_13 = arith.constant 0 : index
    %30 = vector.load %arg2[%c5, %c0_12, %c0_13] : memref<9x3x1xf32, #tpu.memory_space<vmem>>, vector<1x3x1xf32>
    %31 = vector.shape_cast %30 : vector<1x3x1xf32> to vector<3x1xf32>
    %32 = vector.broadcast %31 : vector<3x1xf32> to vector<3x256xf32>
    %33 = arith.mulf %29, %32 : vector<3x256xf32>
    %34 = arith.addf %28, %33 : vector<3x256xf32>
    %c224_i32 = arith.constant 224 : i32
    %35 = tpu.dynamic_rotate %0 by %c224_i32 dim 1 : vector<3x256xf32>, i32 -> vector<3x256xf32>
    %c6 = arith.constant 6 : index
    %c0_14 = arith.constant 0 : index
    %c0_15 = arith.constant 0 : index
    %36 = vector.load %arg2[%c6, %c0_14, %c0_15] : memref<9x3x1xf32, #tpu.memory_space<vmem>>, vector<1x3x1xf32>
    %37 = vector.shape_cast %36 : vector<1x3x1xf32> to vector<3x1xf32>
    %38 = vector.broadcast %37 : vector<3x1xf32> to vector<3x256xf32>
    %39 = arith.mulf %35, %38 : vector<3x256xf32>
    %40 = arith.addf %34, %39 : vector<3x256xf32>
    %c223_i32 = arith.constant 223 : i32
    %41 = tpu.dynamic_rotate %0 by %c223_i32 dim 1 : vector<3x256xf32>, i32 -> vector<3x256xf32>
    %c7 = arith.constant 7 : index
    %c0_16 = arith.constant 0 : index
    %c0_17 = arith.constant 0 : index
    %42 = vector.load %arg2[%c7, %c0_16, %c0_17] : memref<9x3x1xf32, #tpu.memory_space<vmem>>, vector<1x3x1xf32>
    %43 = vector.shape_cast %42 : vector<1x3x1xf32> to vector<3x1xf32>
    %44 = vector.broadcast %43 : vector<3x1xf32> to vector<3x256xf32>
    %45 = arith.mulf %41, %44 : vector<3x256xf32>
    %46 = arith.addf %40, %45 : vector<3x256xf32>
    %c222_i32 = arith.constant 222 : i32
    %47 = tpu.dynamic_rotate %0 by %c222_i32 dim 1 : vector<3x256xf32>, i32 -> vector<3x256xf32>
    %c8 = arith.constant 8 : index
    %c0_18 = arith.constant 0 : index
    %c0_19 = arith.constant 0 : index
    %48 = vector.load %arg2[%c8, %c0_18, %c0_19] : memref<9x3x1xf32, #tpu.memory_space<vmem>>, vector<1x3x1xf32>
    %49 = vector.shape_cast %48 : vector<1x3x1xf32> to vector<3x1xf32>
    %50 = vector.broadcast %49 : vector<3x1xf32> to vector<3x256xf32>
    %51 = arith.mulf %47, %50 : vector<3x256xf32>
    %52 = arith.addf %46, %51 : vector<3x256xf32>
    %c0_20 = arith.constant 0 : index
    %c0_21 = arith.constant 0 : index
    %53 = vector.load %arg3[%c0_20, %c0_21] : memref<3x1xf32, #tpu.memory_space<vmem>>, vector<3x1xf32>
    %54 = vector.broadcast %53 : vector<3x1xf32> to vector<3x256xf32>
    %55 = arith.addf %52, %54 : vector<3x256xf32>
    %c0_22 = arith.constant 0 : index
    %c0_23 = arith.constant 0 : index
    %56 = vector.load %arg5[%c0_22, %c0_23] : memref<10x1xf32, #tpu.memory_space<vmem>>, vector<10x1xf32>
    %c0_24 = arith.constant 0 : index
    %c0_25 = arith.constant 0 : index
    %c0_26 = arith.constant 0 : index
    %57 = vector.load %arg4[%c0_24, %c0_25, %c0_26] : memref<3x10x1xf32, #tpu.memory_space<vmem>>, vector<1x10x1xf32>
    %58 = vector.shape_cast %57 : vector<1x10x1xf32> to vector<10x1xf32>
    %59 = vector.extract_strided_slice %55 {offsets = [0, 0], sizes = [1, 256], strides = [1, 1]} : vector<3x256xf32> to vector<1x256xf32>
    %60 = vector.broadcast %58 : vector<10x1xf32> to vector<10x256xf32>
    %61 = vector.broadcast %59 : vector<1x256xf32> to vector<10x256xf32>
    %62 = arith.mulf %60, %61 : vector<10x256xf32>
    %63 = vector.broadcast %56 : vector<10x1xf32> to vector<10x256xf32>
    %64 = arith.addf %63, %62 : vector<10x256xf32>
    %c1_27 = arith.constant 1 : index
    %c0_28 = arith.constant 0 : index
    %c0_29 = arith.constant 0 : index
    %65 = vector.load %arg4[%c1_27, %c0_28, %c0_29] : memref<3x10x1xf32, #tpu.memory_space<vmem>>, vector<1x10x1xf32>
    %66 = vector.shape_cast %65 : vector<1x10x1xf32> to vector<10x1xf32>
    %67 = vector.extract_strided_slice %55 {offsets = [1, 0], sizes = [1, 256], strides = [1, 1]} : vector<3x256xf32> to vector<1x256xf32>
    %68 = vector.broadcast %66 : vector<10x1xf32> to vector<10x256xf32>
    %69 = vector.broadcast %67 : vector<1x256xf32> to vector<10x256xf32>
    %70 = arith.mulf %68, %69 : vector<10x256xf32>
    %71 = arith.addf %64, %70 : vector<10x256xf32>
    %c2_30 = arith.constant 2 : index
    %c0_31 = arith.constant 0 : index
    %c0_32 = arith.constant 0 : index
    %72 = vector.load %arg4[%c2_30, %c0_31, %c0_32] : memref<3x10x1xf32, #tpu.memory_space<vmem>>, vector<1x10x1xf32>
    %73 = vector.shape_cast %72 : vector<1x10x1xf32> to vector<10x1xf32>
    %74 = vector.extract_strided_slice %55 {offsets = [2, 0], sizes = [1, 256], strides = [1, 1]} : vector<3x256xf32> to vector<1x256xf32>
    %75 = vector.broadcast %73 : vector<10x1xf32> to vector<10x256xf32>
    %76 = vector.broadcast %74 : vector<1x256xf32> to vector<10x256xf32>
    %77 = arith.mulf %75, %76 : vector<10x256xf32>
    %78 = arith.addf %71, %77 : vector<10x256xf32>
    %c0_33 = arith.constant 0 : index
    %c0_34 = arith.constant 0 : index
    %79 = vector.load %arg6[%c0_33, %c0_34] : memref<10x256xf32, #tpu.memory_space<vmem>>, vector<10x256xf32>
    tpu.vector_store %arg6[%c0_33, %c0_34], %78 {strides = array<i32>} : memref<10x256xf32, #tpu.memory_space<vmem>>, vector<10x256xf32>,
    return
  }
  func.func @transform_0(%arg0: i32) -> (i32, i32) {
    %c0_i32 = arith.constant 0 : i32
    %c0_i32_0 = arith.constant 0 : i32
    return %c0_i32, %arg0 : i32, i32
  }
  func.func @transform_1(%arg0: i32) -> (i32, i32, i32) {
    %c0_i32 = arith.constant 0 : i32
    %c0_i32_0 = arith.constant 0 : i32
    %c0_i32_1 = arith.constant 0 : i32
    %c0_i32_2 = arith.constant 0 : i32
    return %c0_i32, %c0_i32_0, %c0_i32_1 : i32, i32, i32
  }
  func.func @transform_2(%arg0: i32) -> (i32, i32) {
    %c0_i32 = arith.constant 0 : i32
    %c0_i32_0 = arith.constant 0 : i32
    %c0_i32_1 = arith.constant 0 : i32
    return %c0_i32, %c0_i32_0 : i32, i32
  }
  func.func @transform_3(%arg0: i32) -> (i32, i32, i32) {
    %c0_i32 = arith.constant 0 : i32
    %c0_i32_0 = arith.constant 0 : i32
    %c0_i32_1 = arith.constant 0 : i32
    %c0_i32_2 = arith.constant 0 : i32
    return %c0_i32, %c0_i32_0, %c0_i32_1 : i32, i32, i32
  }
  func.func @transform_4(%arg0: i32) -> (i32, i32) {
    %c0_i32 = arith.constant 0 : i32
    %c0_i32_0 = arith.constant 0 : i32
    %c0_i32_1 = arith.constant 0 : i32
    return %c0_i32, %c0_i32_0 : i32, i32
  }
  func.func @transform_5(%arg0: i32) -> (i32, i32) {
    %c0_i32 = arith.constant 0 : i32
    %c0_i32_0 = arith.constant 0 : i32
    return %c0_i32, %arg0 : i32, i32
  }
}

</mosaic_0001>

<llo_original>
// kernel: tpu_custom_call.1
$region0: #{tpu_custom_call.1}
  #allocation0 [shape = 'u32[]', space=smem, size = 0x4, offset = 0x4, fixed_abs, tag = 'smem constant byte address 0x4 - core index']
  #allocation1 [shape = 'u32[144,128]{1,0:T(1,128)}', space=vmem, size = 0x12000, scoped, tag = 'internal scratch']
  %s0 = inlined_call_operand.vmem [shape: f32[3,512], index: 0, kind: input, shape index: {}]
  %s1 = inlined_call_operand.vmem [shape: f32[9,3,1], index: 1, kind: input, shape index: {}]
  %s2 = inlined_call_operand.vmem [shape: f32[3,1], index: 2, kind: input, shape index: {}]
  %s3 = inlined_call_operand.vmem [shape: f32[3,10,1], index: 3, kind: input, shape index: {}]
  %s4 = inlined_call_operand.vmem [shape: f32[10,1], index: 4, kind: input, shape index: {}]
  %s5 = inlined_call_operand.hbm [shape: f32[10,512], index: 5, kind: output, shape index: {}]
  %s6 = sld [smem:[#allocation0]]
  $region53: #{tpu_custom_call.1} parent=0
    _
  %s8 = ssub.s32 1, %s6
  %s9 = scalar_select 0, %s8, %s6
  $region1: #{tpu_custom_call.1} parent=0
    #allocation2 [shape = 'u8[32768]{0}', space=vmem, size = 0x8000, scoped, tag = 'output window, operand 0']
    #allocation3 [shape = 's32[2]{0}', space=sflag, size = 0x8, scoped, tag = 'scoped memory for tpu_custom_call.1']
    %10 = vsyncpa [#allocation3], 0
    %s11 = scalar_lea.sflag [#allocation3], 1
    %12 = vsyncpa %s11, 0
    loop: start=0, step=1, limit=4
    $region2: #{tpu_custom_call.1} parent=1 // loop_pre_header
      _
    $region3: #{tpu_custom_call.1} parent=1 // loop_header
      %s14 = sphi 0, %s18
      %p15 = scmp.ge.s32.totalorder %s14, 4
      %s24 = sphi 0, %s26
      %s27 = sphi 0, %s24
      %s28 = sphi 0, %s27
      %s44 = sphi 0, %s28
      %s48 = sphi 0, %s48
      %s50 = sphi 0, %s48
      %s51 = sphi 0, %s50
      %s65 = sphi 0, %s51
      %s69 = sphi 0, %s69
      %s71 = sphi 0, %s69
      %s72 = sphi 0, %s71
      %s86 = sphi 0, %s72
      %s90 = sphi 0, %s90
      %s92 = sphi 0, %s90
      %s93 = sphi 0, %s92
      %s107 = sphi 0, %s93
      %s111 = sphi 0, %s111
      %s113 = sphi 0, %s111
      %s114 = sphi 0, %s113
      %s128 = sphi 0, %s114
      %s134 = sphi 0, %s136
      %s137 = sphi 0, %s134
      %s138 = sphi 0, %s137
      %s154 = sphi 0, %s138
    $region4: #{tpu_custom_call.1} parent=1 // loop_header_branch
      %17 = sbr.rel (%p15) target = $region8
    $region5: #{tpu_custom_call.1} parent=1 // loop_body
      %s19 = ssub.s32 %s14, 1
      %s20 = ssub.s32 %s14, 2
      %s21 = sadd.s32 %s14, 1
      %s22 = ssub.s32 %s14, %s21
      %p23 = scmp.eq.s32.totalorder %s22, 0
      %s25 = sadd.s32 %s24, 1
      %s26 = scalar_select %p23, %s24, %s25
      %p29 = pneg %p23
      %p30 = scmp.eq.s32.totalorder %s14, 1
      %p31 = por %p29, %p30
      %p32 = scmp.ne.s32.totalorder %s24, %s27
      %p33 = scmp.eq.s32.totalorder %s14, 0
      %p34 = por %p32, %p33
      %p35 = scmp.ne.s32.totalorder %s24, %s27
      %p36 = scmp.eq.s32.totalorder %s19, 1
      %p37 = por %p35, %p36
      %p38 = scmp.ne.s32.totalorder %s27, %s28
      %p39 = scmp.eq.s32.totalorder %s19, 0
      %p40 = por %p38, %p39
      %p41 = scmp.ne.s32.totalorder %s27, %s28
      %p42 = scmp.eq.s32.totalorder %s20, 1
      %p43 = por %p41, %p42
      %p45 = scmp.ne.s32.totalorder %s28, %s44
      %p46 = scmp.eq.s32.totalorder %s20, 0
      %p47 = por %p45, %p46
      %s49 = sadd.s32 %s48, 1
      %p52 = scmp.eq.s32.totalorder %s14, 1
      %p53 = scmp.ne.s32.totalorder %s48, %s50
      %p54 = scmp.eq.s32.totalorder %s14, 0
      %p55 = por %p53, %p54
      %p56 = scmp.ne.s32.totalorder %s48, %s50
      %p57 = scmp.eq.s32.totalorder %s19, 1
      %p58 = por %p56, %p57
      %p59 = scmp.ne.s32.totalorder %s50, %s51
      %p60 = scmp.eq.s32.totalorder %s19, 0
      %p61 = por %p59, %p60
      %p62 = scmp.ne.s32.totalorder %s50, %s51
      %p63 = scmp.eq.s32.totalorder %s20, 1
      %p64 = por %p62, %p63
      %p66 = scmp.ne.s32.totalorder %s51, %s65
      %p67 = scmp.eq.s32.totalorder %s20, 0
      %p68 = por %p66, %p67
      %s70 = sadd.s32 %s69, 1
      %p73 = scmp.eq.s32.totalorder %s14, 1
      %p74 = scmp.ne.s32.totalorder %s69, %s71
      %p75 = scmp.eq.s32.totalorder %s14, 0
      %p76 = por %p74, %p75
      %p77 = scmp.ne.s32.totalorder %s69, %s71
      %p78 = scmp.eq.s32.totalorder %s19, 1
      %p79 = por %p77, %p78
      %p80 = scmp.ne.s32.totalorder %s71, %s72
      %p81 = scmp.eq.s32.totalorder %s19, 0
      %p82 = por %p80, %p81
      %p83 = scmp.ne.s32.totalorder %s71, %s72
      %p84 = scmp.eq.s32.totalorder %s20, 1
      %p85 = por %p83, %p84
      %p87 = scmp.ne.s32.totalorder %s72, %s86
      %p88 = scmp.eq.s32.totalorder %s20, 0
      %p89 = por %p87, %p88
      %s91 = sadd.s32 %s90, 1
      %p94 = scmp.eq.s32.totalorder %s14, 1
      %p95 = scmp.ne.s32.totalorder %s90, %s92
      %p96 = scmp.eq.s32.totalorder %s14, 0
      %p97 = por %p95, %p96
      %p98 = scmp.ne.s32.totalorder %s90, %s92
      %p99 = scmp.eq.s32.totalorder %s19, 1
      %p100 = por %p98, %p99
      %p101 = scmp.ne.s32.totalorder %s92, %s93
      %p102 = scmp.eq.s32.totalorder %s19, 0
      %p103 = por %p101, %p102
      %p104 = scmp.ne.s32.totalorder %s92, %s93
      %p105 = scmp.eq.s32.totalorder %s20, 1
      %p106 = por %p104, %p105
      %p108 = scmp.ne.s32.totalorder %s93, %s107
      %p109 = scmp.eq.s32.totalorder %s20, 0
      %p110 = por %p108, %p109
      %s112 = sadd.s32 %s111, 1
      %p115 = scmp.eq.s32.totalorder %s14, 1
      %p116 = scmp.ne.s32.totalorder %s111, %s113
      %p117 = scmp.eq.s32.totalorder %s14, 0
      %p118 = por %p116, %p117
      %p119 = scmp.ne.s32.totalorder %s111, %s113
      %p120 = scmp.eq.s32.totalorder %s19, 1
      %p121 = por %p119, %p120
      %p122 = scmp.ne.s32.totalorder %s113, %s114
      %p123 = scmp.eq.s32.totalorder %s19, 0
      %p124 = por %p122, %p123
      %p125 = scmp.ne.s32.totalorder %s113, %s114
      %p126 = scmp.eq.s32.totalorder %s20, 1
      %p127 = por %p125, %p126
      %p129 = scmp.ne.s32.totalorder %s114, %s128
      %p130 = scmp.eq.s32.totalorder %s20, 0
      %p131 = por %p129, %p130
      %s132 = ssub.s32 %s14, %s21
      %p133 = scmp.eq.s32.totalorder %s132, 0
      %s135 = sadd.s32 %s134, 1
      %s136 = scalar_select %p133, %s134, %s135
      %p139 = pneg %p133
      %p140 = scmp.eq.s32.totalorder %s14, 1
      %p141 = por %p139, %p140
      %p142 = scmp.ne.s32.totalorder %s134, %s137
      %p143 = scmp.eq.s32.totalorder %s14, 0
      %p144 = por %p142, %p143
      %p145 = scmp.ne.s32.totalorder %s134, %s137
      %p146 = scmp.eq.s32.totalorder %s19, 1
      %p147 = por %p145, %p146
      %p148 = scmp.ne.s32.totalorder %s137, %s138
      %p149 = scmp.eq.s32.totalorder %s19, 0
      %p150 = por %p148, %p149
      %p151 = scmp.ne.s32.totalorder %s137, %s138
      %p152 = scmp.eq.s32.totalorder %s20, 1
      %p153 = por %p151, %p152
      %p155 = scmp.ne.s32.totalorder %s138, %s154
      %p156 = scmp.eq.s32.totalorder %s20, 0
      %p157 = por %p155, %p156
      %p158 = scmp.le.s32.totalorder 1, %s14
      %p159 = scmp.lt.s32.totalorder %s14, 3
      %p160 = pnand %p158, %p159
      %p161 = pneg %p160
      // Predicated region
      $region9: #{tpu_custom_call.1} parent=5 // pred_check
        _
      $region10: #{tpu_custom_call.1} parent=5 // pred_check_branch
        %163 = sbr.rel (%p160) target = $region12
      $region11: #{tpu_custom_call.1} parent=5 // pred_region
        %s164 = ssub.s32 %s14, 1
        // Predicated region
        $region13: #{tpu_custom_call.1} parent=11 // pred_check
          %p165 = pneg %p61
        $region14: #{tpu_custom_call.1} parent=11 // pred_check_branch
          %167 = sbr.rel (%p165) target = $region16
        $region15: #{tpu_custom_call.1} parent=11 // pred_region
          _
        $region16: #{tpu_custom_call.1} parent=11 // pred_fallthru
          _
        // Predicated region
        $region17: #{tpu_custom_call.1} parent=11 // pred_check
          %p168 = pneg %p82
        $region18: #{tpu_custom_call.1} parent=11 // pred_check_branch
          %170 = sbr.rel (%p168) target = $region20
        $region19: #{tpu_custom_call.1} parent=11 // pred_region
          _
        $region20: #{tpu_custom_call.1} parent=11 // pred_fallthru
          _
        // Predicated region
        $region21: #{tpu_custom_call.1} parent=11 // pred_check
          %p171 = pneg %p103
        $region22: #{tpu_custom_call.1} parent=11 // pred_check_branch
          %173 = sbr.rel (%p171) target = $region24
        $region23: #{tpu_custom_call.1} parent=11 // pred_region
          _
        $region24: #{tpu_custom_call.1} parent=11 // pred_fallthru
          _
        // Predicated region
        $region25: #{tpu_custom_call.1} parent=11 // pred_check
          %p174 = pneg %p124
        $region26: #{tpu_custom_call.1} parent=11 // pred_check_branch
          %176 = sbr.rel (%p174) target = $region28
        $region27: #{tpu_custom_call.1} parent=11 // pred_region
          _
        $region28: #{tpu_custom_call.1} parent=11 // pred_fallthru
          _
      $region12: #{tpu_custom_call.1} parent=5 // pred_fallthru
        _
      %p177 = scmp.lt.s32.totalorder %s14, 2
      // Predicated region
      $region29: #{tpu_custom_call.1} parent=5 // pred_check
        %p178 = pneg %p177
      $region30: #{tpu_custom_call.1} parent=5 // pred_check_branch
        %180 = sbr.rel (%p178) target = $region32
      $region31: #{tpu_custom_call.1} parent=5 // pred_region
        // Predicated region
        $region33: #{tpu_custom_call.1} parent=31 // pred_check
          %p181 = pneg %p34
        $region34: #{tpu_custom_call.1} parent=31 // pred_check_branch
          %183 = sbr.rel (%p181) target = $region36
        $region35: #{tpu_custom_call.1} parent=31 // pred_region
          %s184 = smul.u32 2, %s14
          %p185 = scmp.lt.s32.totalorder %s184, 3
          %s186 = scalar_select %p185, %s184, 3
          %s187 = smul.addr %s186, 4
          %s188 = scalar_lea.vmem %s0, %s187
          %s189 = smul.u32 2, %s14
        $region36: #{tpu_custom_call.1} parent=31 // pred_fallthru
          _
      $region32: #{tpu_custom_call.1} parent=5 // pred_fallthru
        _
      %p190 = scmp.le.s32.totalorder 1, %s14
      %p191 = scmp.lt.s32.totalorder %s14, 3
      %p192 = pnand %p190, %p191
      %p193 = pneg %p192
      // Predicated region
      $region37: #{tpu_custom_call.1} parent=5 // pred_check
        _
      $region38: #{tpu_custom_call.1} parent=5 // pred_check_branch
        %195 = sbr.rel (%p192) target = $region40
      $region39: #{tpu_custom_call.1} parent=5 // pred_region
        %s196 = ssub.s32 %s14, 1
        %s197 = smul.u32 2, %s19
        %p198 = scmp.lt.s32.totalorder %s197, 3
        %s199 = scalar_select %p198, %s197, 3
        %s200 = smul.addr %s199, 4
        %s201 = scalar_lea.vmem %s0, %s200
        %p202 = pneg %p40
        %p203 = pneg %p37
        %p204 = pneg %p61
        %p205 = pneg %p58
        %p206 = pneg %p82
        %p207 = pneg %p79
        %p208 = pneg %p103
        %p209 = pneg %p100
        %p210 = pneg %p124
        %p211 = pneg %p121
        %p212 = pneg %p150
        %p213 = pneg %p147
        %s214 = sand.u32 %s137, 1
        %s215 = scalar_lea.sflag [#allocation3], %s214
        %s216 = sand.u32 %s137, 1
        %s217 = smul.addr %s216, 32
        %s218 = scalar_lea.vmem [#allocation2], %s217
        %s219 = smul.u32 2, %s19
        %p220 = scmp.lt.s32.totalorder %s219, 3
        %s221 = scalar_select %p220, %s219, 3
        %s222 = smul.addr %s221, 4
        %s223 = scalar_lea.vmem %s0, %s222
        %s224 = smul.u32 2, %s19
        %s225 = smul.u32 2, %s19
        %v226 = vld [vmem:[%s223] sm:$0x77]
        %v227 = vld [vmem:[%s1] sm:$0x7]
        %229 = vset.pattern.permute.xlu0 0
        %230 = vperm.xlu0 %229, %v227
        %v231 = vpop.permute.xlu0 %230
        %v233 = vunpack.c.l.s4 839922192
        %v234 = vunpack.c.0.s8 %v233
        %v235 = vlaneseq
        %v236 = vshrl.u32 %v235, 7
        %v237 = vsub.s32 %v234, %v236
        %v238 = vrot.slane %v231, %v237
        %v240 = vmul.f32 %v226, %v238
        %v242 = vcombine.high %v226, %v226
        %244 = vrot.lane.b32.xlu0 %v226, 127
        %v245 = vpop.permute.xlu0 %244
        %246 = vrot.lane.b32.xlu0 %v242, 127
        %v247 = vpop.permute.xlu0 %246
        %v248 = vlaneseq
        %v249 = vand.u32 %v248, 127
        %vm250 = vcmp.lt.s32.totalorder %v249, 127
        %v251 = vsel %vm250, %v245, %v247
        %v252 = vsel %vm250, %v247, %v245
        %s253 = scalar_lea.vmem %s1, 4
        %v254 = vld [vmem:[%s253] sm:$0x7]
        %256 = vset.pattern.permute.xlu0 0
        %257 = vperm.xlu0 %256, %v254
        %v258 = vpop.permute.xlu0 %257
        %v260 = vmul.f32 %v251, %v258
        %v261 = vmul.f32 %v252, %v258
        %v264 = vcombine.low %v260, %v261
        %v266 = vadd.f32 %v240, %v264
        %267 = vrot.lane.b32.xlu0 %v226, 126
        %v268 = vpop.permute.xlu0 %267
        %269 = vrot.lane.b32.xlu0 %v242, 126
        %v270 = vpop.permute.xlu0 %269
        %vm271 = vcmp.lt.s32.totalorder %v249, 126
        %v272 = vsel %vm271, %v268, %v270
        %v273 = vsel %vm271, %v270, %v268
        %s274 = scalar_lea.vmem %s1, 8
        %v275 = vld [vmem:[%s274] sm:$0x7]
        %277 = vset.pattern.permute.xlu0 0
        %278 = vperm.xlu0 %277, %v275
        %v279 = vpop.permute.xlu0 %278
        %v281 = vmul.f32 %v272, %v279
        %v282 = vmul.f32 %v273, %v279
        %v285 = vcombine.low %v281, %v282
        %v287 = vadd.f32 %v266, %v285
        %288 = vrot.lane.b32.xlu0 %v226, 112
        %v289 = vpop.permute.xlu0 %288
        %290 = vrot.lane.b32.xlu0 %v242, 112
        %v291 = vpop.permute.xlu0 %290
        %vm292 = vcmp.lt.s32.totalorder %v249, 112
        %v293 = vsel %vm292, %v289, %v291
        %v294 = vsel %vm292, %v291, %v289
        %s295 = scalar_lea.vmem %s1, 12
        %v296 = vld [vmem:[%s295] sm:$0x7]
        %298 = vset.pattern.permute.xlu0 0
        %299 = vperm.xlu0 %298, %v296
        %v300 = vpop.permute.xlu0 %299
        %v302 = vmul.f32 %v293, %v300
        %v303 = vmul.f32 %v294, %v300
        %v306 = vcombine.low %v302, %v303
        %v308 = vadd.f32 %v287, %v306
        %309 = vrot.lane.b32.xlu0 %v226, 111
        %v310 = vpop.permute.xlu0 %309
        %311 = vrot.lane.b32.xlu0 %v242, 111
        %v312 = vpop.permute.xlu0 %311
        %vm313 = vcmp.lt.s32.totalorder %v249, 111
        %v314 = vsel %vm313, %v310, %v312
        %v315 = vsel %vm313, %v312, %v310
        %s316 = scalar_lea.vmem %s1, 16
        %v317 = vld [vmem:[%s316] sm:$0x7]
        %319 = vset.pattern.permute.xlu0 0
        %320 = vperm.xlu0 %319, %v317
        %v321 = vpop.permute.xlu0 %320
        %v323 = vmul.f32 %v314, %v321
        %v324 = vmul.f32 %v315, %v321
        %v327 = vcombine.low %v323, %v324
        %v329 = vadd.f32 %v308, %v327
        %330 = vrot.lane.b32.xlu0 %v226, 110
        %v331 = vpop.permute.xlu0 %330
        %332 = vrot.lane.b32.xlu0 %v242, 110
        %v333 = vpop.permute.xlu0 %332
        %vm334 = vcmp.lt.s32.totalorder %v249, 110
        %v335 = vsel %vm334, %v331, %v333
        %v336 = vsel %vm334, %v333, %v331
        %s337 = scalar_lea.vmem %s1, 20
        %v338 = vld [vmem:[%s337] sm:$0x7]
        %340 = vset.pattern.permute.xlu0 0
        %341 = vperm.xlu0 %340, %v338
        %v342 = vpop.permute.xlu0 %341
        %v344 = vmul.f32 %v335, %v342
        %v345 = vmul.f32 %v336, %v342
        %v348 = vcombine.low %v344, %v345
        %v350 = vadd.f32 %v329, %v348
        %351 = vrot.lane.b32.xlu0 %v226, 96
        %v352 = vpop.permute.xlu0 %351
        %353 = vrot.lane.b32.xlu0 %v242, 96
        %v354 = vpop.permute.xlu0 %353
        %vm355 = vcmp.lt.s32.totalorder %v249, 96
        %v356 = vsel %vm355, %v352, %v354
        %v357 = vsel %vm355, %v354, %v352
        %s358 = scalar_lea.vmem %s1, 24
        %v359 = vld [vmem:[%s358] sm:$0x7]
        %361 = vset.pattern.permute.xlu0 0
        %362 = vperm.xlu0 %361, %v359
        %v363 = vpop.permute.xlu0 %362
        %v365 = vmul.f32 %v356, %v363
        %v366 = vmul.f32 %v357, %v363
        %v369 = vcombine.low %v365, %v366
        %v371 = vadd.f32 %v350, %v369
        %372 = vrot.lane.b32.xlu0 %v226, 95
        %v373 = vpop.permute.xlu0 %372
        %374 = vrot.lane.b32.xlu0 %v242, 95
        %v375 = vpop.permute.xlu0 %374
        %vm376 = vcmp.lt.s32.totalorder %v249, 95
        %v377 = vsel %vm376, %v373, %v375
        %v378 = vsel %vm376, %v375, %v373
        %s379 = scalar_lea.vmem %s1, 28
        %v380 = vld [vmem:[%s379] sm:$0x7]
        %382 = vset.pattern.permute.xlu0 0
        %383 = vperm.xlu0 %382, %v380
        %v384 = vpop.permute.xlu0 %383
        %v386 = vmul.f32 %v377, %v384
        %v387 = vmul.f32 %v378, %v384
        %v390 = vcombine.low %v386, %v387
        %v392 = vadd.f32 %v371, %v390
        %393 = vrot.lane.b32.xlu0 %v226, 94
        %v394 = vpop.permute.xlu0 %393
        %395 = vrot.lane.b32.xlu0 %v242, 94
        %v396 = vpop.permute.xlu0 %395
        %vm397 = vcmp.lt.s32.totalorder %v249, 94
        %v398 = vsel %vm397, %v394, %v396
        %v399 = vsel %vm397, %v396, %v394
        %s400 = scalar_lea.vmem %s1, 32
        %v401 = vld [vmem:[%s400] sm:$0x7]
        %403 = vset.pattern.permute.xlu0 0
        %404 = vperm.xlu0 %403, %v401
        %v405 = vpop.permute.xlu0 %404
        %v407 = vmul.f32 %v398, %v405
        %v408 = vmul.f32 %v399, %v405
        %v411 = vcombine.low %v407, %v408
        %v413 = vadd.f32 %v392, %v411
        %v414 = vld [vmem:[%s2] sm:$0x7]
        %416 = vset.pattern.permute.xlu0 0
        %417 = vperm.xlu0 %416, %v414
        %v418 = vpop.permute.xlu0 %417
        %v420 = vunpack.c.l.s4 839922192
        %v421 = vunpack.c.0.s8 %v420
        %v422 = vlaneseq
        %v423 = vshrl.u32 %v422, 7
        %v424 = vsub.s32 %v421, %v423
        %v425 = vrot.slane %v418, %v424
        %v427 = vadd.f32 %v413, %v425
        %v428 = vld [vmem:[%s4] sm:$0xff]
        %v429 = vld [vmem:[%s4 + $0x8] sm:$0x3]
        %v430 = vld [vmem:[%s3] sm:$0xff]
        %v431 = vld [vmem:[%s3 + $0x8] sm:$0x3]
        %433 = vset.pattern.permute.xlu0 0
        %434 = vperm.xlu0 %433, %v430
        %v435 = vpop.permute.xlu0 %434
        %438 = vset.pattern.permute.xlu0 0
        %439 = vperm.xlu0 %438, %v431
        %v440 = vpop.permute.xlu0 %439
        %v443 = vlaneseq
        %v444 = vshrl.u32 %v443, 7
        %v445 = vsub.s32 0, %v444
        %v446 = vrot.slane %v427, %v445
        %v447 = vlaneseq
        %v448 = vshrl.u32 %v447, 7
        %v449 = vsub.s32 4, %v448
        %v450 = vrot.slane %v427, %v449
        %v453 = vlaneseq
        %v454 = vshrl.u32 %v453, 7
        %v455 = vsub.s32 0, %v454
        %v456 = vrot.slane %v446, %v455
        %v457 = vlaneseq
        %v458 = vshrl.u32 %v457, 7
        %v459 = vsub.s32 0, %v458
        %v460 = vrot.slane %v450, %v459
        %v461 = vmul.f32 %v435, %v456
        %v462 = vmul.f32 %v435, %v460
        %v463 = vmul.f32 %v440, %v456
        %v464 = vmul.f32 %v440, %v460
        %466 = vset.pattern.permute.xlu0 0
        %467 = vperm.xlu0 %466, %v428
        %v468 = vpop.permute.xlu0 %467
        %471 = vset.pattern.permute.xlu0 0
        %472 = vperm.xlu0 %471, %v429
        %v473 = vpop.permute.xlu0 %472
        %v475 = vadd.f32 %v468, %v461
        %v476 = vadd.f32 %v468, %v462
        %v477 = vadd.f32 %v473, %v463
        %v478 = vadd.f32 %v473, %v464
        %s479 = scalar_lea.vmem %s3, 16
        %v480 = vld [vmem:[%s479] sm:$0xff]
        %v481 = vld [vmem:[%s479 + $0x8] sm:$0x3]
        %483 = vset.pattern.permute.xlu0 0
        %484 = vperm.xlu0 %483, %v480
        %v485 = vpop.permute.xlu0 %484
        %488 = vset.pattern.permute.xlu0 0
        %489 = vperm.xlu0 %488, %v481
        %v490 = vpop.permute.xlu0 %489
        %v492 = vlaneseq
        %v493 = vshrl.u32 %v492, 7
        %v494 = vsub.s32 1, %v493
        %v495 = vrot.slane %v427, %v494
        %v496 = vlaneseq
        %v497 = vshrl.u32 %v496, 7
        %v498 = vsub.s32 5, %v497
        %v499 = vrot.slane %v427, %v498
        %v502 = vlaneseq
        %v503 = vshrl.u32 %v502, 7
        %v504 = vsub.s32 1, %v503
        %v505 = vrot.slane %v495, %v504
        %v506 = vlaneseq
        %v507 = vshrl.u32 %v506, 7
        %v508 = vsub.s32 1, %v507
        %v509 = vrot.slane %v499, %v508
        %v510 = vmul.f32 %v485, %v505
        %v511 = vmul.f32 %v485, %v509
        %v512 = vmul.f32 %v490, %v505
        %v513 = vmul.f32 %v490, %v509
        %v514 = vadd.f32 %v475, %v510
        %v515 = vadd.f32 %v476, %v511
        %v516 = vadd.f32 %v477, %v512
        %v517 = vadd.f32 %v478, %v513
        %s518 = scalar_lea.vmem %s3, 32
        %v519 = vld [vmem:[%s518] sm:$0xff]
        %v520 = vld [vmem:[%s518 + $0x8] sm:$0x3]
        %522 = vset.pattern.permute.xlu0 0
        %523 = vperm.xlu0 %522, %v519
        %v524 = vpop.permute.xlu0 %523
        %527 = vset.pattern.permute.xlu0 0
        %528 = vperm.xlu0 %527, %v520
        %v529 = vpop.permute.xlu0 %528
        %v531 = vlaneseq
        %v532 = vshrl.u32 %v531, 7
        %v533 = vsub.s32 2, %v532
        %v534 = vrot.slane %v427, %v533
        %v535 = vlaneseq
        %v536 = vshrl.u32 %v535, 7
        %v537 = vsub.s32 6, %v536
        %v538 = vrot.slane %v427, %v537
        %v541 = vlaneseq
        %v542 = vshrl.u32 %v541, 7
        %v543 = vsub.s32 2, %v542
        %v544 = vrot.slane %v534, %v543
        %v545 = vlaneseq
        %v546 = vshrl.u32 %v545, 7
        %v547 = vsub.s32 2, %v546
        %v548 = vrot.slane %v538, %v547
        %v549 = vmul.f32 %v524, %v544
        %v550 = vmul.f32 %v524, %v548
        %v551 = vmul.f32 %v529, %v544
        %v552 = vmul.f32 %v529, %v548
        %v553 = vadd.f32 %v514, %v549
        %v554 = vadd.f32 %v515, %v550
        %v555 = vadd.f32 %v516, %v551
        %v556 = vadd.f32 %v517, %v552
        %557 = vst [vmem:[%s218] sm:$0xff] %v553
        %558 = vst [vmem:[%s218 + $0x8] sm:$0xff] %v554
        %559 = vst [vmem:[%s218 + $0x10] sm:$0x3] %v555
        %560 = vst [vmem:[%s218 + $0x18] sm:$0x3] %v556
        %s561 = sand.u32 %s137, 1
        %s562 = scalar_lea.sflag [#allocation3], %s561
        %s563 = sand.u32 %s137, 1
        %s564 = smul.addr %s563, 32
        %s565 = scalar_lea.vmem [#allocation2], %s564
        // Predicated region
        $region41: #{tpu_custom_call.1} parent=39 // pred_check
          %p566 = pneg %p147
        $region42: #{tpu_custom_call.1} parent=39 // pred_check_branch
          %568 = sbr.rel (%p566) target = $region44
        $region43: #{tpu_custom_call.1} parent=39 // pred_region
          %s569 = smul.u32 2, %s19
          %s571 = ssub.s32 512, 512
          %572 = vsyncadd %s562, %s571
          %s573 = smul.addr %s569, 128
          %s574 = scalar_lea.hbm %s5, %s573
          %s575 = sshll.u32 %s565, 4
          %s576 = int_to_ptr.vmem [resolvable:$true] %s575
          %581 = dma.vmem_to_hbm [thread:$0]  %s576, 512, %s574, %s562, 256, 512, 16
        $region44: #{tpu_custom_call.1} parent=39 // pred_fallthru
          _
      $region40: #{tpu_custom_call.1} parent=5 // pred_fallthru
        _
      %p582 = scmp.le.s32.totalorder 2, %s14
      // Predicated region
      $region45: #{tpu_custom_call.1} parent=5 // pred_check
        %p583 = pneg %p582
      $region46: #{tpu_custom_call.1} parent=5 // pred_check_branch
        %585 = sbr.rel (%p583) target = $region48
      $region47: #{tpu_custom_call.1} parent=5 // pred_region
        %s586 = ssub.s32 %s14, 2
        // Predicated region
        $region49: #{tpu_custom_call.1} parent=47 // pred_check
          %p587 = pneg %p153
        $region50: #{tpu_custom_call.1} parent=47 // pred_check_branch
          %589 = sbr.rel (%p587) target = $region52
        $region51: #{tpu_custom_call.1} parent=47 // pred_region
          %s590 = sand.u32 %s138, 1
          %s591 = scalar_lea.sflag [#allocation3], %s590
          %s592 = sand.u32 %s138, 1
          %s593 = smul.addr %s592, 32
          %s594 = scalar_lea.vmem [#allocation2], %s593
          %595 = dma.done %s591, 512
        $region52: #{tpu_custom_call.1} parent=47 // pred_fallthru
          _
      $region48: #{tpu_custom_call.1} parent=5 // pred_fallthru
        _
    $region6: #{tpu_custom_call.1} parent=1 // loop_footer
      %s18 = sadd.s32 1, %s14
    $region7: #{tpu_custom_call.1} parent=1 // loop_footer_branch
      %13 = sbr.rel target = $region3
    $region8: #{tpu_custom_call.1} parent=1 // loop_exit
      _
    %596 = vsyncpa [#allocation3], 1
    %s597 = scalar_lea.sflag [#allocation3], 1
    %598 = vsyncpa %s597, 1

</llo_original>
